<compile_context>
chip_gen: v5e
topology: v5e:2x2
jax: 0.10.0
libtpu: 0.0.40
codegen_flags: <defaults>
</compile_context>

<pallas_src>
import functools

import jax
import jax.numpy as jnp
from jax.experimental import pallas as pl
from jax.experimental.pallas import tpu as pltpu


def _round_up(x, m):
    return (x + m - 1) // m * m


def _fused_kernel(x_ref, s_ref, w_ref, g_ref, b_ref, o_ref, acc_ref, *, p_real, eps):
    # x_ref : (P_pad, tk)  f32 activations (NHWC-flattened, zero-padded rows/cols)
    # s_ref : (1, tk)      f32 per-channel scale (x438)
    # w_ref : (tk, tn)     bf16 1x1-conv weight slice (transposed)
    # g_ref : (1, tn)      f32 BN gamma
    # b_ref : (1, tn)      f32 BN beta
    # o_ref : (P_pad, tn)  output tile (resident across the K/reduction grid axis)
    # acc_ref: (P_pad, tn) f32 VMEM accumulator scratch
    k = pl.program_id(1)

    @pl.when(k == 0)
    def _():
        acc_ref[...] = jnp.zeros_like(acc_ref)

    # Scale the small x tile in f32 (free under the weight DMA), cast to the
    # MXU-native compute dtype, accumulate in f32.
    xs = (x_ref[...].astype(jnp.float32) * s_ref[...]).astype(w_ref.dtype)
    acc_ref[...] += jnp.dot(xs, w_ref[...], preferred_element_type=jnp.float32)

    @pl.when(k == pl.num_programs(1) - 1)
    def _():
        # BatchNorm (training-mode forward, biased variance) on the VMEM
        # accumulator only — the conv output never round-trips through HBM.
        y = acc_ref[...]
        inv_p = 1.0 / p_real
        mean = jnp.sum(y, axis=0, keepdims=True) * inv_p        # padded rows are 0
        centered = y - mean
        row_ids = jax.lax.broadcasted_iota(jnp.int32, y.shape, 0)
        cmask = jnp.where(row_ids < p_real, centered, 0.0)      # exclude padded rows
        var = jnp.sum(cmask * cmask, axis=0, keepdims=True) * inv_p
        inv_std = jax.lax.rsqrt(var + eps)
        o_ref[...] = (centered * inv_std * g_ref[...] + b_ref[...]).astype(o_ref.dtype)


def mul_conv1x1_batchnorm(x433, x438, conv_w, bn_gamma, bn_beta, *,
                          tile_n=512, tile_k=512,
                          compute_dtype=jnp.bfloat16, eps=1e-5):
    """x433: (N, Cin, H, W), x438: (1, Cin, 1, 1), conv_w: (Cout, Cin, 1, 1)."""
    N, Cin, H, W = x433.shape
    Cout = conv_w.shape[0]
    P = N * H * W

    # Channel tiles: multiples of 128 (lane width), clamped to the padded extent.
    tk = min(_round_up(tile_k, 128), _round_up(Cin, 128))
    tn = min(_round_up(tile_n, 128), _round_up(Cout, 128))
    k_pad = _round_up(Cin, tk)
    n_pad = _round_up(Cout, tn)
    p_pad = _round_up(P, 8)

    # NCHW -> (P, Cin), zero-padded so every tile is full and lane-dense.
    x_flat = jnp.transpose(x433, (0, 2, 3, 1)).reshape(P, Cin)
    x_flat = jnp.pad(x_flat, ((0, p_pad - P), (0, k_pad - Cin)))
    scale = jnp.pad(x438.reshape(1, Cin).astype(jnp.float32),
                    ((0, 0), (0, k_pad - Cin)))
    w_t = conv_w.reshape(Cout, Cin).T.astype(compute_dtype)          # (Cin, Cout)
    w_t = jnp.pad(w_t, ((0, k_pad - Cin), (0, n_pad - Cout)))
    gamma = jnp.pad(bn_gamma.reshape(1, Cout).astype(jnp.float32),
                    ((0, 0), (0, n_pad - Cout)), constant_values=1.0)
    beta = jnp.pad(bn_beta.reshape(1, Cout).astype(jnp.float32),
                   ((0, 0), (0, n_pad - Cout)))

    grid = (n_pad // tn, k_pad // tk)   # (Cout tiles = parallel, Cin tiles = reduction)

    x_bytes = x_flat.dtype.itemsize
    w_bytes = jnp.dtype(compute_dtype).itemsize
    o_bytes = jnp.dtype(x433.dtype).itemsize
    # Double-buffered inputs/output + f32 accumulator, with 2x headroom.
    vmem_est = (2 * (p_pad * tk * x_bytes + tk * tn * w_bytes + tk * 4 + 2 * tn * 4)
                + 2 * p_pad * tn * o_bytes + p_pad * tn * 4)
    vmem_limit = int(min(100 * 1024 * 1024, max(2 * vmem_est, 8 * 1024 * 1024)))

    kernel = functools.partial(_fused_kernel, p_real=P, eps=eps)

    out_flat = pl.pallas_call(
        kernel,
        out_shape=jax.ShapeDtypeStruct((p_pad, n_pad), x433.dtype),
        grid_spec=pltpu.PrefetchScalarGridSpec(
            num_scalar_prefetch=0,
            grid=grid,
            in_specs=[
                pl.BlockSpec((p_pad, tk), lambda j, k: (0, k)),   # x
                pl.BlockSpec((1, tk), lambda j, k: (0, k)),       # per-channel scale
                pl.BlockSpec((tk, tn), lambda j, k: (k, j)),      # conv weight (bf16)
                pl.BlockSpec((1, tn), lambda j, k: (0, j)),       # BN gamma
                pl.BlockSpec((1, tn), lambda j, k: (0, j)),       # BN beta
            ],
            out_specs=pl.BlockSpec((p_pad, tn), lambda j, k: (0, j)),
            scratch_shapes=[pltpu.VMEM((p_pad, tn), jnp.float32)],
        ),
        compiler_params=pltpu.CompilerParams(
            dimension_semantics=("parallel", "arbitrary"),
            vmem_limit_bytes=vmem_limit,
        ),
        cost_estimate=pl.CostEstimate(
            flops=2 * p_pad * k_pad * n_pad,
            bytes_accessed=(x_flat.size * x_bytes + w_t.size * w_bytes
                            + p_pad * n_pad * o_bytes),
            transcendentals=0,
        ),
    )(x_flat, scale, w_t, gamma, beta)

    out = out_flat[:P, :Cout]
    return jnp.transpose(out.reshape(N, H, W, Cout), (0, 3, 1, 2))


def _reference(x433, x438, conv_w, bn_gamma, bn_beta, compute_dtype=jnp.float32, eps=1e-5):
    # Module semantics: mul -> 1x1 conv -> BatchNorm (batch stats, biased variance).
    N, Cin, H, W = x433.shape
    Cout = conv_w.shape[0]
    x_flat = jnp.transpose(x438 * x433, (0, 2, 3, 1)).reshape(-1, Cin).astype(compute_dtype)
    w_t = conv_w.reshape(Cout, Cin).T.astype(compute_dtype)
    y = jnp.dot(x_flat, w_t, preferred_element_type=jnp.float32)
    mean = jnp.mean(y, axis=0, keepdims=True)
    var = jnp.mean((y - mean) ** 2, axis=0, keepdims=True)
    out = (y - mean) * jax.lax.rsqrt(var + eps) * bn_gamma.reshape(1, -1) + bn_beta.reshape(1, -1)
    return jnp.transpose(out.reshape(N, H, W, Cout), (0, 3, 1, 2)).astype(x433.dtype)


if __name__ == "__main__":
    # Small shapes consistent with the module (original: N=1, Cin=Cout=7392, H=W=7).
    # C=320 exercises the channel zero-padding path (320 -> 384); H=W=7 exercises
    # the P=49 -> 56 row padding + masked BN statistics.
    N, C, H, W = 1, 320, 7, 7
    key = jax.random.PRNGKey(0)
    k1, k2, k3, k4, k5 = jax.random.split(key, 5)

    x433 = jax.random.normal(k1, (N, C, H, W), dtype=jnp.float32)
    x438 = jax.random.normal(k2, (1, C, 1, 1), dtype=jnp.float32)
    conv_w = jax.random.normal(k3, (C, C, 1, 1), dtype=jnp.float32) * 0.02
    bn_gamma = 1.0 + 0.1 * jax.random.normal(k4, (C,), dtype=jnp.float32)
    bn_beta = 0.1 * jax.random.normal(k5, (C,), dtype=jnp.float32)

    # Small tiles so the test exercises the (Cout, Cin) grid, the K accumulation
    # and the pl.when epilogue (grid = (3, 3) here).
    out = mul_conv1x1_batchnorm(x433, x438, conv_w, bn_gamma, bn_beta,
                                tile_n=128, tile_k=128)
    out = jax.block_until_ready(out)
    assert out.shape == (N, C, H, W)

    # Tight check vs a reference that quantizes the matmul operands exactly like
    # the kernel (bf16 operands, f32 accumulation).
    ref_bf16 = _reference(x433, x438, conv_w, bn_gamma, bn_beta,
                          compute_dtype=jnp.bfloat16)
    assert jnp.allclose(out, ref_bf16, atol=3e-3, rtol=3e-3), \
        float(jnp.max(jnp.abs(out - ref_bf16)))

    # Looser check vs pure-f32 module semantics (only bf16 weight-streaming error).
    ref_f32 = _reference(x433, x438, conv_w, bn_gamma, bn_beta,
                         compute_dtype=jnp.float32)
    assert jnp.allclose(out, ref_f32, atol=8e-2, rtol=8e-2), \
        float(jnp.max(jnp.abs(out - ref_f32)))

    print("KERNEL_OK")
</pallas_src>

<mosaic_0001>
module attributes {stable_mosaic.version = 11 : i64} {
  func.func @_fused_kernel(%arg0: i32, %arg1: i32, %arg2: memref<56x128xf32, #tpu.memory_space<vmem>>, %arg3: memref<1x128xf32, #tpu.memory_space<vmem>>, %arg4: memref<128x128xbf16, #tpu.memory_space<vmem>>, %arg5: memref<1x128xf32, #tpu.memory_space<vmem>>, %arg6: memref<1x128xf32, #tpu.memory_space<vmem>>, %arg7: memref<56x128xf32, #tpu.memory_space<vmem>>, %arg8: memref<56x128xf32, #tpu.memory_space<vmem>>) attributes {dimension_semantics = [#tpu.dimension_semantics<parallel>, #tpu.dimension_semantics<arbitrary>], iteration_bounds = array<i64: 3, 3>, scalar_prefetch = 0 : i64, scratch_operands = 1 : i64, tpu.core_type = #tpu.core_type<tc>, window_params = [{transform_indices = @transform_0, window_bounds = array<i64: 56, 128>}, {transform_indices = @transform_1, window_bounds = array<i64: 1, 128>}, {transform_indices = @transform_2, window_bounds = array<i64: 128, 128>}, {transform_indices = @transform_3, window_bounds = array<i64: 1, 128>}, {transform_indices = @transform_4, window_bounds = array<i64: 1, 128>}, {transform_indices = @transform_5, window_bounds = array<i64: 56, 128>}]} {
    %c0_i32 = arith.constant 0 : i32
    %0 = arith.cmpi eq, %arg1, %c0_i32 : i32
    %1 = arith.extui %0 : i1 to i32
    %c0_i32_0 = arith.constant 0 : i32
    %2 = arith.cmpi ne, %1, %c0_i32_0 : i32
    scf.if %2 {
      %cst_11 = arith.constant 0.000000e+00 : f32
      %16 = vector.broadcast %cst_11 : f32 to vector<56x128xf32>
      %c0_12 = arith.constant 0 : index
      %c0_13 = arith.constant 0 : index
      %17 = vector.load %arg8[%c0_12, %c0_13] : memref<56x128xf32, #tpu.memory_space<vmem>>, vector<56x128xf32>
      tpu.vector_store %arg8[%c0_12, %c0_13], %16 {strides = array<i32>} : memref<56x128xf32, #tpu.memory_space<vmem>>, vector<56x128xf32>,
    } else {
    }
    %c0 = arith.constant 0 : index
    %c0_1 = arith.constant 0 : index
    %3 = vector.load %arg2[%c0, %c0_1] : memref<56x128xf32, #tpu.memory_space<vmem>>, vector<56x128xf32>
    %c0_2 = arith.constant 0 : index
    %c0_3 = arith.constant 0 : index
    %4 = vector.load %arg3[%c0_2, %c0_3] : memref<1x128xf32, #tpu.memory_space<vmem>>, vector<1x128xf32>
    %5 = vector.broadcast %4 : vector<1x128xf32> to vector<56x128xf32>
    %6 = arith.mulf %3, %5 : vector<56x128xf32>
    %7 = arith.truncf %6 : vector<56x128xf32> to vector<56x128xbf16>
    %c0_4 = arith.constant 0 : index
    %c0_5 = arith.constant 0 : index
    %8 = vector.load %arg8[%c0_4, %c0_5] : memref<56x128xf32, #tpu.memory_space<vmem>>, vector<56x128xf32>
    %c0_6 = arith.constant 0 : index
    %c0_7 = arith.constant 0 : index
    %9 = vector.load %arg4[%c0_6, %c0_7] : memref<128x128xbf16, #tpu.memory_space<vmem>>, vector<128x128xbf16>
    %cst = arith.constant dense<0.000000e+00> : vector<56x128xf32>
    %10 = tpu.matmul %7, %9, %cst {dimension_numbers = #tpu.dot_dimension_numbers<[1], [0], [0], [1], [0, 0, 1, 1], [], []>} : vector<56x128xbf16>, vector<128x128xbf16>, vector<56x128xf32> -> vector<56x128xf32>
    %11 = arith.addf %8, %10 : vector<56x128xf32>
    %c0_8 = arith.constant 0 : index
    %c0_9 = arith.constant 0 : index
    %12 = vector.load %arg8[%c0_8, %c0_9] : memref<56x128xf32, #tpu.memory_space<vmem>>, vector<56x128xf32>
    tpu.vector_store %arg8[%c0_8, %c0_9], %11 {strides = array<i32>} : memref<56x128xf32, #tpu.memory_space<vmem>>, vector<56x128xf32>,
    %c2_i32 = arith.constant 2 : i32
    %13 = arith.cmpi eq, %arg1, %c2_i32 : i32
    %14 = arith.extui %13 : i1 to i32
    %c0_i32_10 = arith.constant 0 : i32
    %15 = arith.cmpi ne, %14, %c0_i32_10 : i32
    scf.if %15 {
      %c0_11 = arith.constant 0 : index
      %c0_12 = arith.constant 0 : index
      %16 = vector.load %arg8[%c0_11, %c0_12] : memref<56x128xf32, #tpu.memory_space<vmem>>, vector<56x128xf32>
      %cst_13 = arith.constant dense<0.000000e+00> : vector<128xf32>
      %17 = vector.multi_reduction <add>, %16, %cst_13 [0] : vector<56x128xf32> to vector<128xf32>
      %18 = vector.shape_cast %17 : vector<128xf32> to vector<1x128xf32>
      %cst_14 = arith.constant 0.0204081628 : f32
      %19 = vector.broadcast %cst_14 : f32 to vector<1x128xf32>
      %20 = arith.mulf %18, %19 : vector<1x128xf32>
      %21 = vector.broadcast %20 : vector<1x128xf32> to vector<56x128xf32>
      %22 = arith.subf %16, %21 : vector<56x128xf32>
      %23 = tpu.iota {dimensions = array<i32: 0>} : vector<56x128xi32>
      %c49_i32 = arith.constant 49 : i32
      %24 = vector.broadcast %c49_i32 : i32 to vector<56x128xi32>
      %25 = arith.cmpi slt, %23, %24 : vector<56x128xi32>
      %cst_15 = arith.constant 0.000000e+00 : f32
      %26 = vector.broadcast %cst_15 : f32 to vector<56x128xf32>
      %27 = arith.select %25, %22, %26 : vector<56x128xi1>, vector<56x128xf32>
      %28 = arith.mulf %27, %27 : vector<56x128xf32>
      %cst_16 = arith.constant dense<0.000000e+00> : vector<128xf32>
      %29 = vector.multi_reduction <add>, %28, %cst_16 [0] : vector<56x128xf32> to vector<128xf32>
      %30 = vector.shape_cast %29 : vector<128xf32> to vector<1x128xf32>
      %cst_17 = arith.constant 0.0204081628 : f32
      %31 = vector.broadcast %cst_17 : f32 to vector<1x128xf32>
      %32 = arith.mulf %30, %31 : vector<1x128xf32>
      %cst_18 = arith.constant 9.99999974E-6 : f32
      %33 = vector.broadcast %cst_18 : f32 to vector<1x128xf32>
      %34 = arith.addf %32, %33 : vector<1x128xf32>
      %35 = math.rsqrt %34 : vector<1x128xf32>
      %36 = vector.broadcast %35 : vector<1x128xf32> to vector<56x128xf32>
      %37 = arith.mulf %22, %36 : vector<56x128xf32>
      %c0_19 = arith.constant 0 : index
      %c0_20 = arith.constant 0 : index
      %38 = vector.load %arg5[%c0_19, %c0_20] : memref<1x128xf32, #tpu.memory_space<vmem>>, vector<1x128xf32>
      %39 = vector.broadcast %38 : vector<1x128xf32> to vector<56x128xf32>
      %40 = arith.mulf %37, %39 : vector<56x128xf32>
      %c0_21 = arith.constant 0 : index
      %c0_22 = arith.constant 0 : index
      %41 = vector.load %arg6[%c0_21, %c0_22] : memref<1x128xf32, #tpu.memory_space<vmem>>, vector<1x128xf32>
      %42 = vector.broadcast %41 : vector<1x128xf32> to vector<56x128xf32>
      %43 = arith.addf %40, %42 : vector<56x128xf32>
      %c0_23 = arith.constant 0 : index
      %c0_24 = arith.constant 0 : index
      %44 = vector.load %arg7[%c0_23, %c0_24] : memref<56x128xf32, #tpu.memory_space<vmem>>, vector<56x128xf32>
      tpu.vector_store %arg7[%c0_23, %c0_24], %43 {strides = array<i32>} : memref<56x128xf32, #tpu.memory_space<vmem>>, vector<56x128xf32>,
    } else {
    }
    return
  }
  func.func @transform_0(%arg0: i32, %arg1: i32) -> (i32, i32) {
    %c0_i32 = arith.constant 0 : i32
    %c0_i32_0 = arith.constant 0 : i32
    return %c0_i32, %arg1 : i32, i32
  }
  func.func @transform_1(%arg0: i32, %arg1: i32) -> (i32, i32) {
    %c0_i32 = arith.constant 0 : i32
    %c0_i32_0 = arith.constant 0 : i32
    return %c0_i32, %arg1 : i32, i32
  }
  func.func @transform_2(%arg0: i32, %arg1: i32) -> (i32, i32) {
    %c0_i32 = arith.constant 0 : i32
    return %arg1, %arg0 : i32, i32
  }
  func.func @transform_3(%arg0: i32, %arg1: i32) -> (i32, i32) {
    %c0_i32 = arith.constant 0 : i32
    %c0_i32_0 = arith.constant 0 : i32
    return %c0_i32, %arg0 : i32, i32
  }
  func.func @transform_4(%arg0: i32, %arg1: i32) -> (i32, i32) {
    %c0_i32 = arith.constant 0 : i32
    %c0_i32_0 = arith.constant 0 : i32
    return %c0_i32, %arg0 : i32, i32
  }
  func.func @transform_5(%arg0: i32, %arg1: i32) -> (i32, i32) {
    %c0_i32 = arith.constant 0 : i32
    %c0_i32_0 = arith.constant 0 : i32
    return %c0_i32, %arg0 : i32, i32
  }
}

</mosaic_0001>

<llo_original>
// kernel: tpu_custom_call.1
$region0: #{tpu_custom_call.1}
  #allocation0 [shape = 'u32[]', space=smem, size = 0x4, offset = 0x4, fixed_abs, tag = 'smem constant byte address 0x4 - core index']
  #allocation1 [shape = 'u32[72,128]{1,0:T(1,128)}', space=vmem, size = 0x9000, scoped, tag = 'internal scratch']
  #allocation2 [shape = 'f32[56,128]{1,0:T(8,128)}', space=vmem, size = 0x7000, scoped, tag = 'scratch operand']
  %s0 = inlined_call_operand.hbm [shape: f32[56,384], index: 0, kind: input, shape index: {}]
  %s1 = inlined_call_operand.hbm [shape: f32[1,384], index: 1, kind: input, shape index: {}]
  %s2 = inlined_call_operand.hbm [shape: bf16[384,384], index: 2, kind: input, shape index: {}]
  %s3 = inlined_call_operand.hbm [shape: f32[1,384], index: 3, kind: input, shape index: {}]
  %s4 = inlined_call_operand.vmem [shape: f32[1,384], index: 4, kind: input, shape index: {}]
  %s5 = inlined_call_operand.hbm [shape: f32[56,384], index: 5, kind: output, shape index: {}]
  %s6 = sld [smem:[#allocation0]]
  $region77: #{tpu_custom_call.1} parent=0
    _
  %s8 = ssub.s32 1, %s6
  %s9 = scalar_select 0, %s8, %s6
  $region1: #{tpu_custom_call.1} parent=0
    #allocation3 [shape = 'u8[57344]{0}', space=vmem, size = 0xe000, scoped, tag = 'input window, operand 0']
    #allocation4 [shape = 's32[2]{0}', space=sflag, size = 0x8, scoped, tag = 'scoped memory for tpu_custom_call.1']
    #allocation5 [shape = 's32[2]{0}', space=sflag, size = 0x8, scoped, tag = 'scoped memory for tpu_custom_call.1']
    #allocation6 [shape = 'u8[1024]{0}', space=vmem, size = 0x400, scoped, tag = 'input window, operand 1']
    #allocation7 [shape = 's32[2]{0}', space=sflag, size = 0x8, scoped, tag = 'scoped memory for tpu_custom_call.1']
    #allocation8 [shape = 'u8[65536]{0}', space=vmem, size = 0x10000, scoped, tag = 'input window, operand 2']
    #allocation9 [shape = 'u8[1024]{0}', space=vmem, size = 0x400, scoped, tag = 'input window, operand 3']
    #allocation10 [shape = 's32[2]{0}', space=sflag, size = 0x8, scoped, tag = 'scoped memory for tpu_custom_call.1']
    #allocation11 [shape = 'u8[57344]{0}', space=vmem, size = 0xe000, scoped, tag = 'output window, operand 0']
    %10 = vsyncpa [#allocation4], 0
    %s11 = scalar_lea.sflag [#allocation4], 1
    %12 = vsyncpa %s11, 0
    %13 = vsyncpa [#allocation7], 0
    %s14 = scalar_lea.sflag [#allocation7], 1
    %15 = vsyncpa %s14, 0
    %16 = vsyncpa [#allocation10], 0
    %s17 = scalar_lea.sflag [#allocation10], 1
    %18 = vsyncpa %s17, 0
    %19 = vsyncpa [#allocation5], 0
    %s20 = scalar_lea.sflag [#allocation5], 1
    %21 = vsyncpa %s20, 0
    loop: start=0, step=1, limit=11
    $region2: #{tpu_custom_call.1} parent=1 // loop_pre_header
      _
    $region3: #{tpu_custom_call.1} parent=1 // loop_header
      %s23 = sphi 0, %s27
      %p24 = scmp.ge.s32.totalorder %s23, 11
      %s30 = sphi 0, %s42
      %s31 = sphi 0, %s38
      %s32 = sphi 0, %s30
      %s33 = sphi 0, %s31
      %s34 = sphi 0, %s32
      %s35 = sphi 0, %s33
      %s45 = sphi 0, %s47
      %s48 = sphi 0, %s45
      %s49 = sphi 0, %s48
      %s65 = sphi 0, %s49
      %s71 = sphi 0, %s73
      %s74 = sphi 0, %s71
      %s75 = sphi 0, %s74
      %s91 = sphi 0, %s75
      %s99 = sphi 0, %s101
      %s102 = sphi 0, %s99
      %s103 = sphi 0, %s102
      %s119 = sphi 0, %s103
      %s125 = sphi 0, %s127
      %s128 = sphi 0, %s125
      %s129 = sphi 0, %s128
      %s145 = sphi 0, %s129
      %s151 = sphi 0, %s153
      %s154 = sphi 0, %s151
      %s155 = sphi 0, %s154
      %s171 = sphi 0, %s155
      %s177 = sphi 0, %s179
      %s180 = sphi 0, %s177
      %s181 = sphi 0, %s180
      %s197 = sphi 0, %s181
    $region4: #{tpu_custom_call.1} parent=1 // loop_header_branch
      %26 = sbr.rel (%p24) target = $region8
    $region5: #{tpu_custom_call.1} parent=1 // loop_body
      %s28 = ssub.s32 %s23, 1
      %s29 = ssub.s32 %s23, 2
      %s36 = sadd.s32 1, %s31
      %p37 = scmp.ge.s32.totalorder %s36, 3
      %s38 = scalar_select %p37, 0, %s36
      %s39 = sadd.s32 1, %s30
      %s40 = scalar_select %p37, %s39, %s30
      %p41 = scmp.ge.s32.totalorder %s40, 3
      %s42 = scalar_select %p41, 0, %s40
      %s43 = ssub.s32 %s31, %s38
      %p44 = scmp.eq.s32.totalorder %s43, 0
      %s46 = sadd.s32 %s45, 1
      %s47 = scalar_select %p44, %s45, %s46
      %p50 = pneg %p44
      %p51 = scmp.eq.s32.totalorder %s23, 8
      %p52 = por %p50, %p51
      %p53 = scmp.ne.s32.totalorder %s45, %s48
      %p54 = scmp.eq.s32.totalorder %s23, 0
      %p55 = por %p53, %p54
      %p56 = scmp.ne.s32.totalorder %s45, %s48
      %p57 = scmp.eq.s32.totalorder %s28, 8
      %p58 = por %p56, %p57
      %p59 = scmp.ne.s32.totalorder %s48, %s49
      %p60 = scmp.eq.s32.totalorder %s28, 0
      %p61 = por %p59, %p60
      %p62 = scmp.ne.s32.totalorder %s48, %s49
      %p63 = scmp.eq.s32.totalorder %s29, 8
      %p64 = por %p62, %p63
      %p66 = scmp.ne.s32.totalorder %s49, %s65
      %p67 = scmp.eq.s32.totalorder %s29, 0
      %p68 = por %p66, %p67
      %s69 = ssub.s32 %s31, %s38
      %p70 = scmp.eq.s32.totalorder %s69, 0
      %s72 = sadd.s32 %s71, 1
      %s73 = scalar_select %p70, %s71, %s72
      %p76 = pneg %p70
      %p77 = scmp.eq.s32.totalorder %s23, 8
      %p78 = por %p76, %p77
      %p79 = scmp.ne.s32.totalorder %s71, %s74
      %p80 = scmp.eq.s32.totalorder %s23, 0
      %p81 = por %p79, %p80
      %p82 = scmp.ne.s32.totalorder %s71, %s74
      %p83 = scmp.eq.s32.totalorder %s28, 8
      %p84 = por %p82, %p83
      %p85 = scmp.ne.s32.totalorder %s74, %s75
      %p86 = scmp.eq.s32.totalorder %s28, 0
      %p87 = por %p85, %p86
      %p88 = scmp.ne.s32.totalorder %s74, %s75
      %p89 = scmp.eq.s32.totalorder %s29, 8
      %p90 = por %p88, %p89
      %p92 = scmp.ne.s32.totalorder %s75, %s91
      %p93 = scmp.eq.s32.totalorder %s29, 0
      %p94 = por %p92, %p93
      %s95 = ssub.s32 %s31, %s38
      %s96 = ssub.s32 %s30, %s42
      %s97 = sor.u32 %s95, %s96
      %p98 = scmp.eq.s32.totalorder %s97, 0
      %s100 = sadd.s32 %s99, 1
      %s101 = scalar_select %p98, %s99, %s100
      %p104 = pneg %p98
      %p105 = scmp.eq.s32.totalorder %s23, 8
      %p106 = por %p104, %p105
      %p107 = scmp.ne.s32.totalorder %s99, %s102
      %p108 = scmp.eq.s32.totalorder %s23, 0
      %p109 = por %p107, %p108
      %p110 = scmp.ne.s32.totalorder %s99, %s102
      %p111 = scmp.eq.s32.totalorder %s28, 8
      %p112 = por %p110, %p111
      %p113 = scmp.ne.s32.totalorder %s102, %s103
      %p114 = scmp.eq.s32.totalorder %s28, 0
      %p115 = por %p113, %p114
      %p116 = scmp.ne.s32.totalorder %s102, %s103
      %p117 = scmp.eq.s32.totalorder %s29, 8
      %p118 = por %p116, %p117
      %p120 = scmp.ne.s32.totalorder %s103, %s119
      %p121 = scmp.eq.s32.totalorder %s29, 0
      %p122 = por %p120, %p121
      %s123 = ssub.s32 %s30, %s42
      %p124 = scmp.eq.s32.totalorder %s123, 0
      %s126 = sadd.s32 %s125, 1
      %s127 = scalar_select %p124, %s125, %s126
      %p130 = pneg %p124
      %p131 = scmp.eq.s32.totalorder %s23, 8
      %p132 = por %p130, %p131
      %p133 = scmp.ne.s32.totalorder %s125, %s128
      %p134 = scmp.eq.s32.totalorder %s23, 0
      %p135 = por %p133, %p134
      %p136 = scmp.ne.s32.totalorder %s125, %s128
      %p137 = scmp.eq.s32.totalorder %s28, 8
      %p138 = por %p136, %p137
      %p139 = scmp.ne.s32.totalorder %s128, %s129
      %p140 = scmp.eq.s32.totalorder %s28, 0
      %p141 = por %p139, %p140
      %p142 = scmp.ne.s32.totalorder %s128, %s129
      %p143 = scmp.eq.s32.totalorder %s29, 8
      %p144 = por %p142, %p143
      %p146 = scmp.ne.s32.totalorder %s129, %s145
      %p147 = scmp.eq.s32.totalorder %s29, 0
      %p148 = por %p146, %p147
      %s149 = ssub.s32 %s30, %s42
      %p150 = scmp.eq.s32.totalorder %s149, 0
      %s152 = sadd.s32 %s151, 1
      %s153 = scalar_select %p150, %s151, %s152
      %p156 = pneg %p150
      %p157 = scmp.eq.s32.totalorder %s23, 8
      %p158 = por %p156, %p157
      %p159 = scmp.ne.s32.totalorder %s151, %s154
      %p160 = scmp.eq.s32.totalorder %s23, 0
      %p161 = por %p159, %p160
      %p162 = scmp.ne.s32.totalorder %s151, %s154
      %p163 = scmp.eq.s32.totalorder %s28, 8
      %p164 = por %p162, %p163
      %p165 = scmp.ne.s32.totalorder %s154, %s155
      %p166 = scmp.eq.s32.totalorder %s28, 0
      %p167 = por %p165, %p166
      %p168 = scmp.ne.s32.totalorder %s154, %s155
      %p169 = scmp.eq.s32.totalorder %s29, 8
      %p170 = por %p168, %p169
      %p172 = scmp.ne.s32.totalorder %s155, %s171
      %p173 = scmp.eq.s32.totalorder %s29, 0
      %p174 = por %p172, %p173
      %s175 = ssub.s32 %s30, %s42
      %p176 = scmp.eq.s32.totalorder %s175, 0
      %s178 = sadd.s32 %s177, 1
      %s179 = scalar_select %p176, %s177, %s178
      %p182 = pneg %p176
      %p183 = scmp.eq.s32.totalorder %s23, 8
      %p184 = por %p182, %p183
      %p185 = scmp.ne.s32.totalorder %s177, %s180
      %p186 = scmp.eq.s32.totalorder %s23, 0
      %p187 = por %p185, %p186
      %p188 = scmp.ne.s32.totalorder %s177, %s180
      %p189 = scmp.eq.s32.totalorder %s28, 8
      %p190 = por %p188, %p189
      %p191 = scmp.ne.s32.totalorder %s180, %s181
      %p192 = scmp.eq.s32.totalorder %s28, 0
      %p193 = por %p191, %p192
      %p194 = scmp.ne.s32.totalorder %s180, %s181
      %p195 = scmp.eq.s32.totalorder %s29, 8
      %p196 = por %p194, %p195
      %p198 = scmp.ne.s32.totalorder %s181, %s197
      %p199 = scmp.eq.s32.totalorder %s29, 0
      %p200 = por %p198, %p199
      %p201 = scmp.le.s32.totalorder 1, %s23
      %p202 = scmp.lt.s32.totalorder %s23, 10
      %p203 = pnand %p201, %p202
      %p204 = pneg %p203
      // Predicated region
      $region9: #{tpu_custom_call.1} parent=5 // pred_check
        _
      $region10: #{tpu_custom_call.1} parent=5 // pred_check_branch
        %206 = sbr.rel (%p203) target = $region12
      $region11: #{tpu_custom_call.1} parent=5 // pred_region
        %s207 = ssub.s32 %s23, 1
      $region12: #{tpu_custom_call.1} parent=5 // pred_fallthru
        _
      %p208 = scmp.lt.s32.totalorder %s23, 9
      // Predicated region
      $region13: #{tpu_custom_call.1} parent=5 // pred_check
        %p209 = pneg %p208
      $region14: #{tpu_custom_call.1} parent=5 // pred_check_branch
        %211 = sbr.rel (%p209) target = $region16
      $region15: #{tpu_custom_call.1} parent=5 // pred_region
        // Predicated region
        $region17: #{tpu_custom_call.1} parent=15 // pred_check
          %p212 = pneg %p55
        $region18: #{tpu_custom_call.1} parent=15 // pred_check_branch
          %214 = sbr.rel (%p212) target = $region20
        $region19: #{tpu_custom_call.1} parent=15 // pred_region
          %s215 = sand.u32 %s45, 1
          %s216 = scalar_lea.sflag [#allocation4], %s215
          %s217 = sand.u32 %s45, 1
          %s218 = smul.addr %s217, 56
          %s219 = scalar_lea.vmem [#allocation3], %s218
          %221 = vsyncadd %s216, 0
          %s222 = smul.addr %s31, 8
          %s223 = scalar_lea.hbm %s0, %s222
          %s224 = sshll.u32 %s223, 4
          %s225 = int_to_ptr.hbm [resolvable:$true] %s224
          %s226 = sshll.u32 %s219, 4
          %s227 = int_to_ptr.vmem [resolvable:$true] %s226
          %232 = dma.hbm_to_vmem [thread:$0]  %s225, 896, %s227, %s216, 384, 128, 8
        $region20: #{tpu_custom_call.1} parent=15 // pred_fallthru
          _
        // Predicated region
        $region21: #{tpu_custom_call.1} parent=15 // pred_check
          %p233 = pneg %p81
        $region22: #{tpu_custom_call.1} parent=15 // pred_check_branch
          %235 = sbr.rel (%p233) target = $region24
        $region23: #{tpu_custom_call.1} parent=15 // pred_region
          %s236 = sand.u32 %s23, 1
          %s237 = scalar_lea.sflag [#allocation7], %s236
          %s238 = sand.u32 %s71, 1
          %s239 = scalar_lea.vmem [#allocation6], %s238
          %241 = vsyncadd %s237, 0
          %s242 = scalar_lea.hbm %s1, %s31
          %s244 = sshll.u32 %s242, 4
          %s245 = int_to_ptr.hbm [resolvable:$true] %s244
          %s246 = sshll.u32 %s239, 4
          %s247 = int_to_ptr.vmem [resolvable:$true] %s246
          %249 = dma.hbm_to_vmem [thread:$0]  %s245, 16, %s247, %s237
        $region24: #{tpu_custom_call.1} parent=15 // pred_fallthru
          _
        // Predicated region
        $region25: #{tpu_custom_call.1} parent=15 // pred_check
          %p250 = pneg %p109
        $region26: #{tpu_custom_call.1} parent=15 // pred_check_branch
          %252 = sbr.rel (%p250) target = $region28
        $region27: #{tpu_custom_call.1} parent=15 // pred_region
          %s253 = sand.u32 %s23, 1
          %s254 = scalar_lea.sflag [#allocation7], %s253
          %s255 = sand.u32 %s99, 1
          %s256 = smul.addr %s255, 64
          %s257 = scalar_lea.vmem [#allocation8], %s256
          %s258 = smul.u32 16, %s31
          %260 = vsyncadd %s254, 0
          %s261 = smul.addr %s258, 3
          %s262 = sadd.s32 %s30, %s261
          %s263 = smul.addr %s262, 4
          %s264 = scalar_lea.hbm %s2, %s263
          %s265 = sshll.u32 %s264, 4
          %s266 = int_to_ptr.hbm [resolvable:$true] %s265
          %s267 = sshll.u32 %s257, 4
          %s268 = int_to_ptr.vmem [resolvable:$true] %s267
          %273 = dma.hbm_to_vmem [thread:$0]  %s266, 1024, %s268, %s254, 192, 64, 4
        $region28: #{tpu_custom_call.1} parent=15 // pred_fallthru
          _
        // Predicated region
        $region29: #{tpu_custom_call.1} parent=15 // pred_check
          %p274 = pneg %p135
        $region30: #{tpu_custom_call.1} parent=15 // pred_check_branch
          %276 = sbr.rel (%p274) target = $region32
        $region31: #{tpu_custom_call.1} parent=15 // pred_region
          %s277 = sand.u32 %s125, 1
          %s278 = scalar_lea.sflag [#allocation10], %s277
          %s279 = sand.u32 %s125, 1
          %s280 = scalar_lea.vmem [#allocation9], %s279
          %282 = vsyncadd %s278, 0
          %s283 = scalar_lea.hbm %s3, %s30
          %s285 = sshll.u32 %s283, 4
          %s286 = int_to_ptr.hbm [resolvable:$true] %s285
          %s287 = sshll.u32 %s280, 4
          %s288 = int_to_ptr.vmem [resolvable:$true] %s287
          %290 = dma.hbm_to_vmem [thread:$0]  %s286, 16, %s288, %s278
        $region32: #{tpu_custom_call.1} parent=15 // pred_fallthru
          _
        // Predicated region
        $region33: #{tpu_custom_call.1} parent=15 // pred_check
          %p291 = pneg %p161
        $region34: #{tpu_custom_call.1} parent=15 // pred_check_branch
          %293 = sbr.rel (%p291) target = $region36
        $region35: #{tpu_custom_call.1} parent=15 // pred_region
          %p294 = scmp.lt.s32.totalorder %s30, 2
          %s295 = scalar_select %p294, %s30, 2
          %s296 = scalar_lea.vmem %s4, %s295
        $region36: #{tpu_custom_call.1} parent=15 // pred_fallthru
          _
      $region16: #{tpu_custom_call.1} parent=5 // pred_fallthru
        _
      %p297 = scmp.le.s32.totalorder 1, %s23
      %p298 = scmp.lt.s32.totalorder %s23, 10
      %p299 = pnand %p297, %p298
      %p300 = pneg %p299
      // Predicated region
      $region37: #{tpu_custom_call.1} parent=5 // pred_check
        _
      $region38: #{tpu_custom_call.1} parent=5 // pred_check_branch
        %302 = sbr.rel (%p299) target = $region40
      $region39: #{tpu_custom_call.1} parent=5 // pred_region
        %s303 = ssub.s32 %s23, 1
        %s304 = sand.u32 %s48, 1
        %s305 = scalar_lea.sflag [#allocation4], %s304
        %s306 = sand.u32 %s48, 1
        %s307 = smul.addr %s306, 56
        %s308 = scalar_lea.vmem [#allocation3], %s307
        // Predicated region
        $region41: #{tpu_custom_call.1} parent=39 // pred_check
          %p309 = pneg %p61
        $region42: #{tpu_custom_call.1} parent=39 // pred_check_branch
          %311 = sbr.rel (%p309) target = $region44
        $region43: #{tpu_custom_call.1} parent=39 // pred_region
          %313 = dma.done %s305, 896
        $region44: #{tpu_custom_call.1} parent=39 // pred_fallthru
          _
        %s314 = sand.u32 %s28, 1
        %s315 = scalar_lea.sflag [#allocation7], %s314
        %s316 = sand.u32 %s74, 1
        %s317 = scalar_lea.vmem [#allocation6], %s316
        // Predicated region
        $region45: #{tpu_custom_call.1} parent=39 // pred_check
          %p318 = pneg %p87
        $region46: #{tpu_custom_call.1} parent=39 // pred_check_branch
          %320 = sbr.rel (%p318) target = $region48
        $region47: #{tpu_custom_call.1} parent=39 // pred_region
          %322 = dma.done %s315, 16
        $region48: #{tpu_custom_call.1} parent=39 // pred_fallthru
          _
        %s323 = sand.u32 %s28, 1
        %s324 = scalar_lea.sflag [#allocation7], %s323
        %s325 = sand.u32 %s102, 1
        %s326 = smul.addr %s325, 64
        %s327 = scalar_lea.vmem [#allocation8], %s326
        // Predicated region
        $region49: #{tpu_custom_call.1} parent=39 // pred_check
          %p328 = pneg %p115
        $region50: #{tpu_custom_call.1} parent=39 // pred_check_branch
          %330 = sbr.rel (%p328) target = $region52
        $region51: #{tpu_custom_call.1} parent=39 // pred_region
          %332 = dma.done %s324, 1024
        $region52: #{tpu_custom_call.1} parent=39 // pred_fallthru
          _
        %s333 = sand.u32 %s128, 1
        %s334 = scalar_lea.sflag [#allocation10], %s333
        %s335 = sand.u32 %s128, 1
        %s336 = scalar_lea.vmem [#allocation9], %s335
        // Predicated region
        $region53: #{tpu_custom_call.1} parent=39 // pred_check
          %p337 = pneg %p141
        $region54: #{tpu_custom_call.1} parent=39 // pred_check_branch
          %339 = sbr.rel (%p337) target = $region56
        $region55: #{tpu_custom_call.1} parent=39 // pred_region
          %341 = dma.done %s334, 16
        $region56: #{tpu_custom_call.1} parent=39 // pred_fallthru
          _
        %s342 = sand.u32 %s48, 1
        %s343 = scalar_lea.sflag [#allocation4], %s342
        %s344 = sand.u32 %s48, 1
        %s345 = smul.addr %s344, 56
        %s346 = scalar_lea.vmem [#allocation3], %s345
        %p347 = pneg %p61
        %p348 = pneg %p58
        %s349 = sand.u32 %s28, 1
        %s350 = scalar_lea.sflag [#allocation7], %s349
        %s351 = sand.u32 %s74, 1
        %s352 = scalar_lea.vmem [#allocation6], %s351
        %p353 = pneg %p87
        %p354 = pneg %p84
        %s355 = sand.u32 %s28, 1
        %s356 = scalar_lea.sflag [#allocation7], %s355
        %s357 = sand.u32 %s102, 1
        %s358 = smul.addr %s357, 64
        %s359 = scalar_lea.vmem [#allocation8], %s358
        %p360 = pneg %p115
        %p361 = pneg %p112
        %s362 = sand.u32 %s128, 1
        %s363 = scalar_lea.sflag [#allocation10], %s362
        %s364 = sand.u32 %s128, 1
        %s365 = scalar_lea.vmem [#allocation9], %s364
        %p366 = pneg %p141
        %p367 = pneg %p138
        %p368 = scmp.lt.s32.totalorder %s32, 2
        %s369 = scalar_select %p368, %s32, 2
        %s370 = scalar_lea.vmem %s4, %s369
        %p371 = pneg %p167
        %p372 = pneg %p164
        %p373 = pneg %p193
        %p374 = pneg %p190
        %s375 = sand.u32 %s180, 1
        %s376 = scalar_lea.sflag [#allocation5], %s375
        %s377 = sand.u32 %s180, 1
        %s378 = smul.addr %s377, 56
        %s379 = scalar_lea.vmem [#allocation11], %s378
        %s380 = smul.u32 16, %s33
        %p381 = scmp.lt.s32.totalorder %s32, 2
        %s382 = scalar_select %p381, %s32, 2
        %s383 = scalar_lea.vmem %s4, %s382
        %p384 = scmp.eq.s32.totalorder %s33, 0
        // Predicated region
        $region57: #{tpu_custom_call.1} parent=39 // pred_check
          %p385 = pneg %p384
        $region58: #{tpu_custom_call.1} parent=39 // pred_check_branch
          %387 = sbr.rel (%p385) target = $region60
        $region59: #{tpu_custom_call.1} parent=39 // pred_region
          %388 = vst [vmem:[#allocation2] sm:$0xff] 0.0
          %389 = vst [vmem:[#allocation2 + $0x8] sm:$0xff] 0.0
          %390 = vst [vmem:[#allocation2 + $0x10] sm:$0xff] 0.0
          %391 = vst [vmem:[#allocation2 + $0x18] sm:$0xff] 0.0
          %392 = vst [vmem:[#allocation2 + $0x20] sm:$0xff] 0.0
          %393 = vst [vmem:[#allocation2 + $0x28] sm:$0xff] 0.0
          %394 = vst [vmem:[#allocation2 + $0x30] sm:$0xff] 0.0
        $region60: #{tpu_custom_call.1} parent=39 // pred_fallthru
          _
        %v395 = vld [vmem:[%s308] sm:$0xff]
        %v396 = vld [vmem:[%s308 + $0x8] sm:$0xff]
        %v397 = vld [vmem:[%s308 + $0x10] sm:$0xff]
        %v398 = vld [vmem:[%s308 + $0x18] sm:$0xff]
        %v399 = vld [vmem:[%s308 + $0x20] sm:$0xff]
        %v400 = vld [vmem:[%s308 + $0x28] sm:$0xff]
        %v401 = vld [vmem:[%s308 + $0x30] sm:$0xff]
        %v402 = vld [vmem:[%s317] sm:$0x1]
        %v404 = vperm.slane %v402, 0
        %v406 = vmul.f32 %v395, %v404
        %v407 = vmul.f32 %v396, %v404
        %v408 = vmul.f32 %v397, %v404
        %v409 = vmul.f32 %v398, %v404
        %v410 = vmul.f32 %v399, %v404
        %v411 = vmul.f32 %v400, %v404
        %v412 = vmul.f32 %v401, %v404
        %v413 = vpack.c.bf16 %v407, %v406
        %v414 = vpack.c.bf16 %v409, %v408
        %v415 = vpack.c.bf16 %v411, %v410
        %v416 = vpack.c.bf16 %v412, %v412
        %v417 = vld [vmem:[#allocation2] sm:$0xff]
        %v418 = vld [vmem:[#allocation2 + $0x8] sm:$0xff]
        %v419 = vld [vmem:[#allocation2 + $0x10] sm:$0xff]
        %v420 = vld [vmem:[#allocation2 + $0x18] sm:$0xff]
        %v421 = vld [vmem:[#allocation2 + $0x20] sm:$0xff]
        %v422 = vld [vmem:[#allocation2 + $0x28] sm:$0xff]
        %v423 = vld [vmem:[#allocation2 + $0x30] sm:$0xff]
        %v424 = vld [vmem:[%s327] sm:$0xf]
        %v425 = vld [vmem:[%s327 + $0x4] sm:$0xf]
        %v426 = vld [vmem:[%s327 + $0x8] sm:$0xf]
        %v427 = vld [vmem:[%s327 + $0xc] sm:$0xf]
        %v428 = vld [vmem:[%s327 + $0x10] sm:$0xf]
        %v429 = vld [vmem:[%s327 + $0x14] sm:$0xf]
        %v430 = vld [vmem:[%s327 + $0x18] sm:$0xf]
        %v431 = vld [vmem:[%s327 + $0x1c] sm:$0xf]
        %v432 = vld [vmem:[%s327 + $0x20] sm:$0xf]
        %v433 = vld [vmem:[%s327 + $0x24] sm:$0xf]
        %v434 = vld [vmem:[%s327 + $0x28] sm:$0xf]
        %v435 = vld [vmem:[%s327 + $0x2c] sm:$0xf]
        %v436 = vld [vmem:[%s327 + $0x30] sm:$0xf]
        %v437 = vld [vmem:[%s327 + $0x34] sm:$0xf]
        %v438 = vld [vmem:[%s327 + $0x38] sm:$0xf]
        %v439 = vld [vmem:[%s327 + $0x3c] sm:$0xf]
        %v456 = vunpack.c.l.b16 %v424
        %v457 = vunpack.c.l.b16 %v425
        %v458 = vunpack.c.l.b16 %v426
        %v459 = vunpack.c.l.b16 %v427
        %v460 = vunpack.c.l.b16 %v428
        %v461 = vunpack.c.l.b16 %v429
        %v462 = vunpack.c.l.b16 %v430
        %v463 = vunpack.c.l.b16 %v431
        %v464 = vunpack.c.l.b16 %v432
        %v465 = vunpack.c.l.b16 %v433
        %v466 = vunpack.c.l.b16 %v434
        %v467 = vunpack.c.l.b16 %v435
        %v468 = vunpack.c.l.b16 %v436
        %v469 = vunpack.c.l.b16 %v437
        %v470 = vunpack.c.l.b16 %v438
        %v471 = vunpack.c.l.b16 %v439
        %v472 = vpack.c.b16 %v457, %v456
        %v473 = vpack.c.b16 %v459, %v458
        %v474 = vpack.c.b16 %v461, %v460
        %v475 = vpack.c.b16 %v463, %v462
        %v476 = vpack.c.b16 %v465, %v464
        %v477 = vpack.c.b16 %v467, %v466
        %v478 = vpack.c.b16 %v469, %v468
        %v479 = vpack.c.b16 %v471, %v470
        %488 = vmatpush.bf16.msra.mxu0 %v479
        %489 = vmatpush.bf16.msra.mxu0 %v478
        %490 = vmatpush.bf16.msra.mxu0 %v477
        %491 = vmatpush.bf16.msra.mxu0 %v476
        %492 = vmatpush.bf16.msra.mxu0 %v475
        %493 = vmatpush.bf16.msra.mxu0 %v474
        %494 = vmatpush.bf16.msra.mxu0 %v473
        %495 = vmatpush.bf16.msra.mxu0 %v472
        %496 = vmatmul.bf16.gmra.mxu0 %v413
        %v497 = vpop.f32.mrf.mxu0
        %v498 = vadd.f32 0.0, %v497
        %v499 = vpop.f32.mrf.mxu0
        %v500 = vadd.f32 0.0, %v499
        %501 = vmatmul.bf16.gmra.mxu0 %v414
        %v502 = vpop.f32.mrf.mxu0
        %v503 = vadd.f32 0.0, %v502
        %v504 = vpop.f32.mrf.mxu0
        %v505 = vadd.f32 0.0, %v504
        %506 = vmatmul.bf16.gmra.mxu0 %v415
        %v507 = vpop.f32.mrf.mxu0
        %v508 = vadd.f32 0.0, %v507
        %v509 = vpop.f32.mrf.mxu0
        %v510 = vadd.f32 0.0, %v509
        %511 = vmatmul.bf16.gmra.mxu0 %v416
        %v512 = vpop.f32.mrf.mxu0
        %v513 = vadd.f32 0.0, %v512
        %v514 = vpop.f32.mrf.mxu0
        %515 = vdwg.mxu0
        %v516 = vadd.f32 %v417, %v498
        %v517 = vadd.f32 %v418, %v500
        %v518 = vadd.f32 %v419, %v503
        %v519 = vadd.f32 %v420, %v505
        %v520 = vadd.f32 %v421, %v508
        %v521 = vadd.f32 %v422, %v510
        %v522 = vadd.f32 %v423, %v513
        %523 = vst [vmem:[#allocation2] sm:$0xff] %v516
        %524 = vst [vmem:[#allocation2 + $0x8] sm:$0xff] %v517
        %525 = vst [vmem:[#allocation2 + $0x10] sm:$0xff] %v518
        %526 = vst [vmem:[#allocation2 + $0x18] sm:$0xff] %v519
        %527 = vst [vmem:[#allocation2 + $0x20] sm:$0xff] %v520
        %528 = vst [vmem:[#allocation2 + $0x28] sm:$0xff] %v521
        %529 = vst [vmem:[#allocation2 + $0x30] sm:$0xff] %v522
        %p530 = scmp.eq.s32.totalorder %s33, 2
        // Predicated region
        $region61: #{tpu_custom_call.1} parent=39 // pred_check
          %p531 = pneg %p530
        $region62: #{tpu_custom_call.1} parent=39 // pred_check_branch
          %533 = sbr.rel (%p531) target = $region64
        $region63: #{tpu_custom_call.1} parent=39 // pred_region
          %v534 = vld [vmem:[#allocation2] sm:$0xff]
          %v535 = vld [vmem:[#allocation2 + $0x8] sm:$0xff]
          %v536 = vld [vmem:[#allocation2 + $0x10] sm:$0xff]
          %v537 = vld [vmem:[#allocation2 + $0x18] sm:$0xff]
          %v538 = vld [vmem:[#allocation2 + $0x20] sm:$0xff]
          %v539 = vld [vmem:[#allocation2 + $0x28] sm:$0xff]
          %v540 = vld [vmem:[#allocation2 + $0x30] sm:$0xff]
          %v541 = vadd.f32 %v534, %v535
          %v542 = vadd.f32 %v541, %v536
          %v543 = vadd.f32 %v542, %v537
          %v544 = vadd.f32 %v543, %v538
          %v545 = vadd.f32 %v544, %v539
          %v546 = vadd.f32 %v545, %v540
          %v547 = vrot.slane %v546, 4
          %v548 = vadd.f32 %v546, %v547
          %v549 = vrot.slane %v548, 2
          %v550 = vadd.f32 %v548, %v549
          %v551 = vrot.slane %v550, 1
          %v552 = vadd.f32 %v550, %v551
          %v553 = vmul.f32 %v552, 0.020408163
          %v554 = vsub.f32 %v534, %v553
          %v555 = vsub.f32 %v535, %v553
          %v556 = vsub.f32 %v536, %v553
          %v557 = vsub.f32 %v537, %v553
          %v558 = vsub.f32 %v538, %v553
          %v559 = vsub.f32 %v539, %v553
          %v560 = vsub.f32 %v540, %v553
          %v561 = vlaneseq
          %v562 = vshrl.u32 %v561, 7
          %v563 = vadd.s32 %v562, 8
          %v564 = vadd.s32 %v562, 16
          %v565 = vadd.s32 %v562, 24
          %v566 = vadd.s32 %v562, 32
          %v567 = vadd.s32 %v562, 40
          %v568 = vadd.s32 %v562, 48
          %vm569 = vcmp.lt.s32.totalorder %v562, 49
          %vm570 = vcmp.lt.s32.totalorder %v563, 49
          %vm571 = vcmp.lt.s32.totalorder %v564, 49
          %vm572 = vcmp.lt.s32.totalorder %v565, 49
          %vm573 = vcmp.lt.s32.totalorder %v566, 49
          %vm574 = vcmp.lt.s32.totalorder %v567, 49
          %vm575 = vcmp.lt.s32.totalorder %v568, 49
          %v576 = vsel %vm569, %v554, 0.0
          %v577 = vsel %vm570, %v555, 0.0
          %v578 = vsel %vm571, %v556, 0.0
          %v579 = vsel %vm572, %v557, 0.0
          %v580 = vsel %vm573, %v558, 0.0
          %v581 = vsel %vm574, %v559, 0.0
          %v582 = vsel %vm575, %v560, 0.0
          %v583 = vmul.f32 %v576, %v576
          %v584 = vmul.f32 %v577, %v577
          %v585 = vmul.f32 %v578, %v578
          %v586 = vmul.f32 %v579, %v579
          %v587 = vmul.f32 %v580, %v580
          %v588 = vmul.f32 %v581, %v581
          %v589 = vmul.f32 %v582, %v582
          %v590 = vadd.f32 %v583, %v584
          %v591 = vadd.f32 %v590, %v585
          %v592 = vadd.f32 %v591, %v586
          %v593 = vadd.f32 %v592, %v587
          %v594 = vadd.f32 %v593, %v588
          %v595 = vadd.f32 %v594, %v589
          %v596 = vrot.slane %v595, 4
          %v597 = vadd.f32 %v595, %v596
          %v598 = vrot.slane %v597, 2
          %v599 = vadd.f32 %v597, %v598
          %v600 = vrot.slane %v599, 1
          %v601 = vadd.f32 %v599, %v600
          %v602 = vmul.f32 %v601, 0.020408163
          %v603 = vadd.f32 %v602, 1e-05
          %v604 = vrsqrt.pop %v603
          %v605 = vmul.f32 %v604, %v603
          %v606 = vmul.f32 %v605, %v604
          %v607 = vmul.f32 0.5, %v606
          %v608 = vsub.f32 1.5, %v607
          %v609 = vmul.f32 %v604, %v608
          %vm610 = vweird.f32 %v603
          %vm611 = vweird.f32 %v604
          %vm612 = vmor %vm610, %vm611
          %v613 = vsel %vm612, %v604, %v609
          %v614 = vmul.f32 %v554, %v613
          %v615 = vmul.f32 %v555, %v613
          %v616 = vmul.f32 %v556, %v613
          %v617 = vmul.f32 %v557, %v613
          %v618 = vmul.f32 %v558, %v613
          %v619 = vmul.f32 %v559, %v613
          %v620 = vmul.f32 %v560, %v613
          %v621 = vld [vmem:[%s336] sm:$0x1]
          %v623 = vperm.slane %v621, 0
          %v625 = vmul.f32 %v614, %v623
          %v626 = vmul.f32 %v615, %v623
          %v627 = vmul.f32 %v616, %v623
          %v628 = vmul.f32 %v617, %v623
          %v629 = vmul.f32 %v618, %v623
          %v630 = vmul.f32 %v619, %v623
          %v631 = vmul.f32 %v620, %v623
          %v632 = vld [vmem:[%s383] sm:$0x1]
          %v634 = vperm.slane %v632, 0
          %v636 = vadd.f32 %v625, %v634
          %v637 = vadd.f32 %v626, %v634
          %v638 = vadd.f32 %v627, %v634
          %v639 = vadd.f32 %v628, %v634
          %v640 = vadd.f32 %v629, %v634
          %v641 = vadd.f32 %v630, %v634
          %v642 = vadd.f32 %v631, %v634
          %643 = vst [vmem:[%s379] sm:$0xff] %v636
          %644 = vst [vmem:[%s379 + $0x8] sm:$0xff] %v637
          %645 = vst [vmem:[%s379 + $0x10] sm:$0xff] %v638
          %646 = vst [vmem:[%s379 + $0x18] sm:$0xff] %v639
          %647 = vst [vmem:[%s379 + $0x20] sm:$0xff] %v640
          %648 = vst [vmem:[%s379 + $0x28] sm:$0xff] %v641
          %649 = vst [vmem:[%s379 + $0x30] sm:$0xff] %v642
        $region64: #{tpu_custom_call.1} parent=39 // pred_fallthru
          _
        %s650 = sand.u32 %s180, 1
        %s651 = scalar_lea.sflag [#allocation5], %s650
        %s652 = sand.u32 %s180, 1
        %s653 = smul.addr %s652, 56
        %s654 = scalar_lea.vmem [#allocation11], %s653
        // Predicated region
        $region65: #{tpu_custom_call.1} parent=39 // pred_check
          %p655 = pneg %p190
        $region66: #{tpu_custom_call.1} parent=39 // pred_check_branch
          %657 = sbr.rel (%p655) target = $region68
        $region67: #{tpu_custom_call.1} parent=39 // pred_region
          %659 = vsyncadd %s651, 0
          %s660 = smul.addr %s32, 8
          %s661 = scalar_lea.hbm %s5, %s660
          %s662 = sshll.u32 %s654, 4
          %s663 = int_to_ptr.vmem [resolvable:$true] %s662
          %s664 = sshll.u32 %s661, 4
          %s665 = int_to_ptr.hbm [resolvable:$true] %s664
          %670 = dma.vmem_to_hbm [thread:$0]  %s663, 896, %s665, %s651, 128, 384, 8
        $region68: #{tpu_custom_call.1} parent=39 // pred_fallthru
          _
      $region40: #{tpu_custom_call.1} parent=5 // pred_fallthru
        _
      %p671 = scmp.le.s32.totalorder 2, %s23
      // Predicated region
      $region69: #{tpu_custom_call.1} parent=5 // pred_check
        %p672 = pneg %p671
      $region70: #{tpu_custom_call.1} parent=5 // pred_check_branch
        %674 = sbr.rel (%p672) target = $region72
      $region71: #{tpu_custom_call.1} parent=5 // pred_region
        %s675 = ssub.s32 %s23, 2
        // Predicated region
        $region73: #{tpu_custom_call.1} parent=71 // pred_check
          %p676 = pneg %p196
        $region74: #{tpu_custom_call.1} parent=71 // pred_check_branch
          %678 = sbr.rel (%p676) target = $region76
        $region75: #{tpu_custom_call.1} parent=71 // pred_region
          %s679 = sand.u32 %s181, 1
          %s680 = scalar_lea.sflag [#allocation5], %s679
          %s681 = sand.u32 %s181, 1
          %s682 = smul.addr %s681, 56
          %s683 = scalar_lea.vmem [#allocation11], %s682
          %685 = dma.done %s680, 896
        $region76: #{tpu_custom_call.1} parent=71 // pred_fallthru
          _
      $region72: #{tpu_custom_call.1} parent=5 // pred_fallthru
        _
    $region6: #{tpu_custom_call.1} parent=1 // loop_footer
      %s27 = sadd.s32 1, %s23
    $region7: #{tpu_custom_call.1} parent=1 // loop_footer_branch
      %22 = sbr.rel target = $region3
    $region8: #{tpu_custom_call.1} parent=1 // loop_exit
      _
    %686 = vsyncpa [#allocation4], 1
    %s687 = scalar_lea.sflag [#allocation4], 1
    %688 = vsyncpa %s687, 1
    %689 = vsyncpa [#allocation7], 1
    %s690 = scalar_lea.sflag [#allocation7], 1
    %691 = vsyncpa %s690, 1
    %692 = vsyncpa [#allocation10], 1
    %s693 = scalar_lea.sflag [#allocation10], 1
    %694 = vsyncpa %s693, 1
    %695 = vsyncpa [#allocation5], 1
    %s696 = scalar_lea.sflag [#allocation5], 1
    %697 = vsyncpa %s696, 1

</llo_original>
